<compile_context>
chip_gen: v7x
topology: tpu7x:2x2x1
jax: 0.10.0
libtpu: 0.0.40
codegen_flags: <defaults>
</compile_context>

<pallas_src>
import jax
import jax.numpy as jnp
from jax.experimental import pallas as pl
from jax.experimental.pallas import tpu as pltpu


def shrinkage_kernel(x_ref, w1_ref, b1_ref, w2_ref, b2_ref, o_ref):
    # x_ref: (TB, C, L) tile of the input.
    x = x_ref[...].astype(jnp.float32)                       # (TB, C, L)
    x_abs = jnp.abs(x)

    # AdaptiveAvgPool1d(1) over L, flatten -> (TB, C)
    gap = jnp.mean(x_abs, axis=2)                             # (TB, C)

    # average over channel dim, keepdim -> (TB, 1)
    average = jnp.mean(gap, axis=1, keepdims=True)            # (TB, 1)

    # fc: (Linear + folded eval BatchNorm) -> ReLU -> Linear -> Sigmoid
    h = jnp.dot(gap, w1_ref[...], preferred_element_type=jnp.float32) + b1_ref[...]
    h = jnp.maximum(h, 0.0)
    h = jnp.dot(h, w2_ref[...], preferred_element_type=jnp.float32) + b2_ref[...]
    sig = jax.nn.sigmoid(h)                                   # (TB, C)

    # per-(row, channel) threshold (always >= 0)
    thr = average * sig                                       # (TB, C)

    # soft thresholding with sign transfer (single select instead of sign*mul)
    n_sub = jnp.maximum(x_abs - thr[:, :, None], 0.0)         # (TB, C, L)
    o_ref[...] = jnp.where(x < 0.0, -n_sub, n_sub).astype(o_ref.dtype)


def _choose_tb(B, C, L, budget_bytes=24 << 20, max_tb=128):
    """Largest divisor of B (<= max_tb) whose double-buffered in+out tiles fit
    the VMEM budget; prefer >= 2 grid steps so 2-TC chips get both cores."""
    per_row = C * L * 4                       # f32 bytes per batch row
    best = 1
    for tb in range(1, min(B, max_tb) + 1):
        if B % tb:
            continue
        # in + out blocks, each double-buffered
        if 4 * tb * per_row <= budget_bytes:
            best = tb
    if B // best < 2 and best > 1:
        for tb in range(best - 1, 0, -1):
            if B % tb == 0 and B // tb >= 2:
                best = tb
                break
    return best


def shrinkage_forward(x, w1, b1, gamma, beta, rmean, rvar, w2, b2, eps=1e-5):
    """x: (B, C, L) float32.  Linear weights wN have PyTorch shape (out, in).
    BatchNorm (eval mode) is folded into the first Linear before launch."""
    B, C, L = x.shape

    # Fold eval-mode BatchNorm into Linear1 (offline, once):
    #   scale_c = gamma_c / sqrt(rvar_c + eps)
    #   h = (gap @ w1.T + b1 - rmean) * scale + beta
    scale = jnp.asarray(gamma) * jax.lax.rsqrt(jnp.asarray(rvar) + eps)   # (C,)
    w1t_eff = jnp.asarray(w1).T * scale[None, :]                          # (C, C)
    b1_eff = (jnp.asarray(b1) - jnp.asarray(rmean)) * scale + jnp.asarray(beta)
    w2t = jnp.asarray(w2).T
    row = lambda v: jnp.asarray(v).reshape(1, C).astype(jnp.float32)

    TB = _choose_tb(B, C, L)
    grid = (B // TB,)

    xspec = pl.BlockSpec((TB, C, L), lambda b: (b, 0, 0))
    wspec = pl.BlockSpec((C, C), lambda b: (0, 0))
    vspec = pl.BlockSpec((1, C), lambda b: (0, 0))

    return pl.pallas_call(
        shrinkage_kernel,
        out_shape=jax.ShapeDtypeStruct((B, C, L), x.dtype),
        grid=grid,
        in_specs=[xspec, wspec, vspec, wspec, vspec],
        out_specs=xspec,
        compiler_params=pltpu.CompilerParams(
            dimension_semantics=("parallel",),
            vmem_limit_bytes=64 << 20,
        ),
    )(x, w1t_eff.astype(jnp.float32), row(b1_eff),
      w2t.astype(jnp.float32), row(b2))


if __name__ == "__main__":
    # gap_size = 1 (required by the fc layer dims).  Shapes kept small but
    # TPU-friendly: C multiple of 8 (sublane), L multiple of 128 (lane).
    B, C, L = 8, 8, 128

    key = jax.random.PRNGKey(0)
    kx, kw1, kb1, kw2, kb2 = jax.random.split(key, 5)

    x = jax.random.normal(kx, (B, C, L), dtype=jnp.float32)

    # Deterministic synthetic parameters (shapes from the module __init__).
    bound = 1.0 / jnp.sqrt(C)
    w1 = jax.random.uniform(kw1, (C, C), minval=-bound, maxval=bound)   # Linear1.weight
    b1 = jax.random.uniform(kb1, (C,), minval=-bound, maxval=bound)     # Linear1.bias
    gamma = jnp.ones((C,), jnp.float32)                                  # BatchNorm1d.weight
    beta = jnp.zeros((C,), jnp.float32)                                  # BatchNorm1d.bias
    rmean = jnp.zeros((C,), jnp.float32)                                 # running_mean
    rvar = jnp.ones((C,), jnp.float32)                                   # running_var
    w2 = jax.random.uniform(kw2, (C, C), minval=-bound, maxval=bound)   # Linear2.weight
    b2 = jax.random.uniform(kb2, (C,), minval=-bound, maxval=bound)     # Linear2.bias

    out = shrinkage_forward(x, w1, b1, gamma, beta, rmean, rvar, w2, b2)
    jax.block_until_ready(out)

    # Pure-JAX reference (unfused eval-mode BatchNorm) to validate the folding.
    x_abs = jnp.abs(x)
    gap = jnp.mean(x_abs, axis=2)
    avg = jnp.mean(gap, axis=1, keepdims=True)
    h = gap @ w1.T + b1
    h = (h - rmean) / jnp.sqrt(rvar + 1e-5) * gamma + beta
    h = jnp.maximum(h, 0.0)
    h = jax.nn.sigmoid(h @ w2.T + b2)
    thr = (avg * h)[:, :, None]
    ref = jnp.sign(x) * jnp.maximum(x_abs - thr, 0.0)

    assert out.shape == (B, C, L) and out.dtype == x.dtype
    assert jnp.allclose(out, ref, atol=1e-5, rtol=1e-5)
    print("KERNEL_OK")
</pallas_src>

<mosaic_0001>
module attributes {stable_mosaic.version = 11 : i64} {
  func.func @shrinkage_kernel(%arg0: i32, %arg1: memref<4x8x128xf32, #tpu.memory_space<vmem>>, %arg2: memref<8x8xf32, #tpu.memory_space<vmem>>, %arg3: memref<1x8xf32, #tpu.memory_space<vmem>>, %arg4: memref<8x8xf32, #tpu.memory_space<vmem>>, %arg5: memref<1x8xf32, #tpu.memory_space<vmem>>, %arg6: memref<4x8x128xf32, #tpu.memory_space<vmem>>) attributes {dimension_semantics = [#tpu.dimension_semantics<parallel>], iteration_bounds = array<i64: 2>, scalar_prefetch = 0 : i64, scratch_operands = 0 : i64, tpu.core_type = #tpu.core_type<tc>, window_params = [{transform_indices = @transform_0, window_bounds = array<i64: 4, 8, 128>}, {pipeline_mode = #tpu.pipeline_mode<synchronous>, transform_indices = @transform_1, window_bounds = array<i64: 8, 8>}, {pipeline_mode = #tpu.pipeline_mode<synchronous>, transform_indices = @transform_2, window_bounds = array<i64: 1, 8>}, {pipeline_mode = #tpu.pipeline_mode<synchronous>, transform_indices = @transform_3, window_bounds = array<i64: 8, 8>}, {pipeline_mode = #tpu.pipeline_mode<synchronous>, transform_indices = @transform_4, window_bounds = array<i64: 1, 8>}, {transform_indices = @transform_5, window_bounds = array<i64: 4, 8, 128>}]} {
    %c0 = arith.constant 0 : index
    %c0_0 = arith.constant 0 : index
    %c0_1 = arith.constant 0 : index
    %0 = vector.load %arg1[%c0, %c0_0, %c0_1] : memref<4x8x128xf32, #tpu.memory_space<vmem>>, vector<4x8x128xf32>
    %1 = math.absf %0 : vector<4x8x128xf32>
    %cst = arith.constant dense<0.000000e+00> : vector<4x8xf32>
    %2 = vector.multi_reduction <add>, %1, %cst [2] : vector<4x8x128xf32> to vector<4x8xf32>
    %cst_2 = arith.constant 1.280000e+02 : f32
    %3 = vector.broadcast %cst_2 : f32 to vector<4x8xf32>
    %4 = arith.divf %2, %3 : vector<4x8xf32>
    %cst_3 = arith.constant dense<0.000000e+00> : vector<4xf32>
    %5 = vector.multi_reduction <add>, %4, %cst_3 [1] : vector<4x8xf32> to vector<4xf32>
    %6 = vector.shape_cast %5 : vector<4xf32> to vector<4x1xf32>
    %cst_4 = arith.constant 8.000000e+00 : f32
    %7 = vector.broadcast %cst_4 : f32 to vector<4x1xf32>
    %8 = arith.divf %6, %7 : vector<4x1xf32>
    %c0_5 = arith.constant 0 : index
    %c0_6 = arith.constant 0 : index
    %9 = vector.load %arg2[%c0_5, %c0_6] : memref<8x8xf32, #tpu.memory_space<vmem>>, vector<8x8xf32>
    %cst_7 = arith.constant dense<0.000000e+00> : vector<4x8xf32>
    %10 = tpu.matmul %4, %9, %cst_7 {dimension_numbers = #tpu.dot_dimension_numbers<[1], [0], [0], [1], [0, 0, 1, 1], [], []>} : vector<4x8xf32>, vector<8x8xf32>, vector<4x8xf32> -> vector<4x8xf32>
    %c0_8 = arith.constant 0 : index
    %c0_9 = arith.constant 0 : index
    %11 = vector.load %arg3[%c0_8, %c0_9] : memref<1x8xf32, #tpu.memory_space<vmem>>, vector<1x8xf32>
    %12 = vector.broadcast %11 : vector<1x8xf32> to vector<4x8xf32>
    %13 = arith.addf %10, %12 : vector<4x8xf32>
    %cst_10 = arith.constant 0.000000e+00 : f32
    %14 = vector.broadcast %cst_10 : f32 to vector<4x8xf32>
    %15 = arith.maximumf %13, %14 : vector<4x8xf32>
    %c0_11 = arith.constant 0 : index
    %c0_12 = arith.constant 0 : index
    %16 = vector.load %arg4[%c0_11, %c0_12] : memref<8x8xf32, #tpu.memory_space<vmem>>, vector<8x8xf32>
    %cst_13 = arith.constant dense<0.000000e+00> : vector<4x8xf32>
    %17 = tpu.matmul %15, %16, %cst_13 {dimension_numbers = #tpu.dot_dimension_numbers<[1], [0], [0], [1], [0, 0, 1, 1], [], []>} : vector<4x8xf32>, vector<8x8xf32>, vector<4x8xf32> -> vector<4x8xf32>
    %c0_14 = arith.constant 0 : index
    %c0_15 = arith.constant 0 : index
    %18 = vector.load %arg5[%c0_14, %c0_15] : memref<1x8xf32, #tpu.memory_space<vmem>>, vector<1x8xf32>
    %19 = vector.broadcast %18 : vector<1x8xf32> to vector<4x8xf32>
    %20 = arith.addf %17, %19 : vector<4x8xf32>
    %21 = arith.negf %20 : vector<4x8xf32>
    %22 = math.exp %21 : vector<4x8xf32>
    %cst_16 = arith.constant 1.000000e+00 : f32
    %23 = vector.broadcast %cst_16 : f32 to vector<4x8xf32>
    %24 = arith.addf %23, %22 : vector<4x8xf32>
    %25 = arith.divf %23, %24 : vector<4x8xf32>
    %26 = vector.broadcast %8 : vector<4x1xf32> to vector<4x8xf32>
    %27 = arith.mulf %26, %25 : vector<4x8xf32>
    %28 = vector.shape_cast %27 : vector<4x8xf32> to vector<4x8x1xf32>
    %29 = vector.broadcast %28 : vector<4x8x1xf32> to vector<4x8x128xf32>
    %30 = arith.subf %1, %29 : vector<4x8x128xf32>
    %cst_17 = arith.constant 0.000000e+00 : f32
    %31 = vector.broadcast %cst_17 : f32 to vector<4x8x128xf32>
    %32 = arith.maximumf %30, %31 : vector<4x8x128xf32>
    %cst_18 = arith.constant 0.000000e+00 : f32
    %33 = vector.broadcast %cst_18 : f32 to vector<4x8x128xf32>
    %34 = arith.cmpf olt, %0, %33 : vector<4x8x128xf32>
    %cst_19 = arith.constant 0.000000e+00 : f32
    %35 = vector.broadcast %cst_19 : f32 to vector<4x8x128xf32>
    %36 = arith.subf %35, %32 : vector<4x8x128xf32>
    %37 = arith.select %34, %36, %32 : vector<4x8x128xi1>, vector<4x8x128xf32>
    %c0_20 = arith.constant 0 : index
    %c0_21 = arith.constant 0 : index
    %c0_22 = arith.constant 0 : index
    %38 = vector.load %arg6[%c0_20, %c0_21, %c0_22] : memref<4x8x128xf32, #tpu.memory_space<vmem>>, vector<4x8x128xf32>
    tpu.vector_store %arg6[%c0_20, %c0_21, %c0_22], %37 {strides = array<i32>} : memref<4x8x128xf32, #tpu.memory_space<vmem>>, vector<4x8x128xf32>,
    return
  }
  func.func @transform_0(%arg0: i32) -> (i32, i32, i32) {
    %c0_i32 = arith.constant 0 : i32
    %c0_i32_0 = arith.constant 0 : i32
    %c0_i32_1 = arith.constant 0 : i32
    return %arg0, %c0_i32, %c0_i32_0 : i32, i32, i32
  }
  func.func @transform_1(%arg0: i32) -> (i32, i32) {
    %c0_i32 = arith.constant 0 : i32
    %c0_i32_0 = arith.constant 0 : i32
    %c0_i32_1 = arith.constant 0 : i32
    return %c0_i32, %c0_i32_0 : i32, i32
  }
  func.func @transform_2(%arg0: i32) -> (i32, i32) {
    %c0_i32 = arith.constant 0 : i32
    %c0_i32_0 = arith.constant 0 : i32
    %c0_i32_1 = arith.constant 0 : i32
    return %c0_i32, %c0_i32_0 : i32, i32
  }
  func.func @transform_3(%arg0: i32) -> (i32, i32) {
    %c0_i32 = arith.constant 0 : i32
    %c0_i32_0 = arith.constant 0 : i32
    %c0_i32_1 = arith.constant 0 : i32
    return %c0_i32, %c0_i32_0 : i32, i32
  }
  func.func @transform_4(%arg0: i32) -> (i32, i32) {
    %c0_i32 = arith.constant 0 : i32
    %c0_i32_0 = arith.constant 0 : i32
    %c0_i32_1 = arith.constant 0 : i32
    return %c0_i32, %c0_i32_0 : i32, i32
  }
  func.func @transform_5(%arg0: i32) -> (i32, i32, i32) {
    %c0_i32 = arith.constant 0 : i32
    %c0_i32_0 = arith.constant 0 : i32
    %c0_i32_1 = arith.constant 0 : i32
    return %arg0, %c0_i32, %c0_i32_0 : i32, i32, i32
  }
}

</mosaic_0001>

<llo_original>
// kernel: tpu_custom_call.1
$region0: #{tpu_custom_call.1}
  #allocation0 [shape = 'u32[]', space=smem, size = 0x4, offset = 0x4, fixed_abs, tag = 'smem constant byte address 0x4 - core index']
  #allocation1 [shape = 'u32[144,128]{1,0:T(1,128)}', space=vmem, size = 0x12000, scoped, tag = 'internal scratch']
  %s0 = inlined_call_operand.hbm [shape: f32[8,8,128], index: 0, kind: input, shape index: {}]
  %s1 = inlined_call_operand.hbm [shape: f32[8,8], index: 1, kind: input, shape index: {}]
  %s2 = inlined_call_operand.hbm [shape: f32[1,8], index: 2, kind: input, shape index: {}]
  %s3 = inlined_call_operand.hbm [shape: f32[8,8], index: 3, kind: input, shape index: {}]
  %s4 = inlined_call_operand.hbm [shape: f32[1,8], index: 4, kind: input, shape index: {}]
  %s5 = inlined_call_operand.hbm [shape: f32[8,8,128], index: 5, kind: output, shape index: {}]
  %s6 = sld [smem:[#allocation0]]
  $region73: #{tpu_custom_call.1} parent=0
    _
  %s8 = ssub.s32 1, %s6
  %s9 = scalar_select 0, %s8, %s6
  $region1: #{tpu_custom_call.1} parent=0
    #allocation2 [shape = 'u8[32768]{0}', space=vmem, size = 0x8000, scoped, tag = 'input window, operand 0']
    #allocation3 [shape = 's32[2]{0}', space=sflag, size = 0x8, scoped, tag = 'scoped memory for tpu_custom_call.1']
    #allocation4 [shape = 's32[2]{0}', space=sflag, size = 0x8, scoped, tag = 'scoped memory for tpu_custom_call.1']
    #allocation5 [shape = 'u8[4096]{0}', space=vmem, size = 0x1000, scoped, tag = 'input window, operand 1, single buffered']
    #allocation6 [shape = 's32[1]{0}', space=sflag, size = 0x4, scoped, tag = 'scoped memory for tpu_custom_call.1']
    #allocation7 [shape = 'u8[512]{0}', space=vmem, size = 0x400, scoped, tag = 'input window, operand 2, single buffered']
    #allocation8 [shape = 'u8[4096]{0}', space=vmem, size = 0x1000, scoped, tag = 'input window, operand 3, single buffered']
    #allocation9 [shape = 's32[1]{0}', space=sflag, size = 0x4, scoped, tag = 'scoped memory for tpu_custom_call.1']
    #allocation10 [shape = 'u8[512]{0}', space=vmem, size = 0x400, scoped, tag = 'input window, operand 4, single buffered']
    #allocation11 [shape = 'u8[32768]{0}', space=vmem, size = 0x8000, scoped, tag = 'output window, operand 0']
    %10 = vsyncpa [#allocation3], 0
    %s11 = scalar_lea.sflag [#allocation3], 1
    %12 = vsyncpa %s11, 0
    %13 = vsyncpa [#allocation6], 0
    %14 = vsyncpa [#allocation9], 0
    %15 = vsyncpa [#allocation4], 0
    %s16 = scalar_lea.sflag [#allocation4], 1
    %17 = vsyncpa %s16, 0
    loop: start=0, step=1, limit=4
    $region2: #{tpu_custom_call.1} parent=1 // loop_pre_header
      _
    $region3: #{tpu_custom_call.1} parent=1 // loop_header
      %s19 = sphi 0, %s23
      %p20 = scmp.ge.s32.totalorder %s19, 4
      %s29 = sphi 0, %s31
      %s32 = sphi 0, %s29
      %s33 = sphi 0, %s32
      %s49 = sphi 0, %s33
      %s53 = sphi 0, %s53
      %s55 = sphi 0, %s53
      %s56 = sphi 0, %s55
      %s70 = sphi 0, %s56
      %s74 = sphi 0, %s74
      %s76 = sphi 0, %s74
      %s77 = sphi 0, %s76
      %s91 = sphi 0, %s77
      %s95 = sphi 0, %s95
      %s97 = sphi 0, %s95
      %s98 = sphi 0, %s97
      %s112 = sphi 0, %s98
      %s116 = sphi 0, %s116
      %s118 = sphi 0, %s116
      %s119 = sphi 0, %s118
      %s133 = sphi 0, %s119
      %s139 = sphi 0, %s141
      %s142 = sphi 0, %s139
      %s143 = sphi 0, %s142
      %s159 = sphi 0, %s143
    $region4: #{tpu_custom_call.1} parent=1 // loop_header_branch
      %22 = sbr.rel (%p20) target = $region8
    $region5: #{tpu_custom_call.1} parent=1 // loop_body
      %s24 = ssub.s32 %s19, 1
      %s25 = ssub.s32 %s19, 2
      %s26 = sadd.s32 %s19, 1
      %s27 = ssub.s32 %s19, %s26
      %p28 = scmp.eq.s32.totalorder %s27, 0
      %s30 = sadd.s32 %s29, 1
      %s31 = scalar_select %p28, %s29, %s30
      %p34 = pneg %p28
      %p35 = scmp.eq.s32.totalorder %s19, 1
      %p36 = por %p34, %p35
      %p37 = scmp.ne.s32.totalorder %s29, %s32
      %p38 = scmp.eq.s32.totalorder %s19, 0
      %p39 = por %p37, %p38
      %p40 = scmp.ne.s32.totalorder %s29, %s32
      %p41 = scmp.eq.s32.totalorder %s24, 1
      %p42 = por %p40, %p41
      %p43 = scmp.ne.s32.totalorder %s32, %s33
      %p44 = scmp.eq.s32.totalorder %s24, 0
      %p45 = por %p43, %p44
      %p46 = scmp.ne.s32.totalorder %s32, %s33
      %p47 = scmp.eq.s32.totalorder %s25, 1
      %p48 = por %p46, %p47
      %p50 = scmp.ne.s32.totalorder %s33, %s49
      %p51 = scmp.eq.s32.totalorder %s25, 0
      %p52 = por %p50, %p51
      %s54 = sadd.s32 %s53, 1
      %p57 = scmp.eq.s32.totalorder %s19, 1
      %p58 = scmp.ne.s32.totalorder %s53, %s55
      %p59 = scmp.eq.s32.totalorder %s19, 0
      %p60 = por %p58, %p59
      %p61 = scmp.ne.s32.totalorder %s53, %s55
      %p62 = scmp.eq.s32.totalorder %s24, 1
      %p63 = por %p61, %p62
      %p64 = scmp.ne.s32.totalorder %s55, %s56
      %p65 = scmp.eq.s32.totalorder %s24, 0
      %p66 = por %p64, %p65
      %p67 = scmp.ne.s32.totalorder %s55, %s56
      %p68 = scmp.eq.s32.totalorder %s25, 1
      %p69 = por %p67, %p68
      %p71 = scmp.ne.s32.totalorder %s56, %s70
      %p72 = scmp.eq.s32.totalorder %s25, 0
      %p73 = por %p71, %p72
      %s75 = sadd.s32 %s74, 1
      %p78 = scmp.eq.s32.totalorder %s19, 1
      %p79 = scmp.ne.s32.totalorder %s74, %s76
      %p80 = scmp.eq.s32.totalorder %s19, 0
      %p81 = por %p79, %p80
      %p82 = scmp.ne.s32.totalorder %s74, %s76
      %p83 = scmp.eq.s32.totalorder %s24, 1
      %p84 = por %p82, %p83
      %p85 = scmp.ne.s32.totalorder %s76, %s77
      %p86 = scmp.eq.s32.totalorder %s24, 0
      %p87 = por %p85, %p86
      %p88 = scmp.ne.s32.totalorder %s76, %s77
      %p89 = scmp.eq.s32.totalorder %s25, 1
      %p90 = por %p88, %p89
      %p92 = scmp.ne.s32.totalorder %s77, %s91
      %p93 = scmp.eq.s32.totalorder %s25, 0
      %p94 = por %p92, %p93
      %s96 = sadd.s32 %s95, 1
      %p99 = scmp.eq.s32.totalorder %s19, 1
      %p100 = scmp.ne.s32.totalorder %s95, %s97
      %p101 = scmp.eq.s32.totalorder %s19, 0
      %p102 = por %p100, %p101
      %p103 = scmp.ne.s32.totalorder %s95, %s97
      %p104 = scmp.eq.s32.totalorder %s24, 1
      %p105 = por %p103, %p104
      %p106 = scmp.ne.s32.totalorder %s97, %s98
      %p107 = scmp.eq.s32.totalorder %s24, 0
      %p108 = por %p106, %p107
      %p109 = scmp.ne.s32.totalorder %s97, %s98
      %p110 = scmp.eq.s32.totalorder %s25, 1
      %p111 = por %p109, %p110
      %p113 = scmp.ne.s32.totalorder %s98, %s112
      %p114 = scmp.eq.s32.totalorder %s25, 0
      %p115 = por %p113, %p114
      %s117 = sadd.s32 %s116, 1
      %p120 = scmp.eq.s32.totalorder %s19, 1
      %p121 = scmp.ne.s32.totalorder %s116, %s118
      %p122 = scmp.eq.s32.totalorder %s19, 0
      %p123 = por %p121, %p122
      %p124 = scmp.ne.s32.totalorder %s116, %s118
      %p125 = scmp.eq.s32.totalorder %s24, 1
      %p126 = por %p124, %p125
      %p127 = scmp.ne.s32.totalorder %s118, %s119
      %p128 = scmp.eq.s32.totalorder %s24, 0
      %p129 = por %p127, %p128
      %p130 = scmp.ne.s32.totalorder %s118, %s119
      %p131 = scmp.eq.s32.totalorder %s25, 1
      %p132 = por %p130, %p131
      %p134 = scmp.ne.s32.totalorder %s119, %s133
      %p135 = scmp.eq.s32.totalorder %s25, 0
      %p136 = por %p134, %p135
      %s137 = ssub.s32 %s19, %s26
      %p138 = scmp.eq.s32.totalorder %s137, 0
      %s140 = sadd.s32 %s139, 1
      %s141 = scalar_select %p138, %s139, %s140
      %p144 = pneg %p138
      %p145 = scmp.eq.s32.totalorder %s19, 1
      %p146 = por %p144, %p145
      %p147 = scmp.ne.s32.totalorder %s139, %s142
      %p148 = scmp.eq.s32.totalorder %s19, 0
      %p149 = por %p147, %p148
      %p150 = scmp.ne.s32.totalorder %s139, %s142
      %p151 = scmp.eq.s32.totalorder %s24, 1
      %p152 = por %p150, %p151
      %p153 = scmp.ne.s32.totalorder %s142, %s143
      %p154 = scmp.eq.s32.totalorder %s24, 0
      %p155 = por %p153, %p154
      %p156 = scmp.ne.s32.totalorder %s142, %s143
      %p157 = scmp.eq.s32.totalorder %s25, 1
      %p158 = por %p156, %p157
      %p160 = scmp.ne.s32.totalorder %s143, %s159
      %p161 = scmp.eq.s32.totalorder %s25, 0
      %p162 = por %p160, %p161
      %p163 = scmp.le.s32.totalorder 1, %s19
      %p164 = scmp.lt.s32.totalorder %s19, 3
      %p165 = pnand %p163, %p164
      %p166 = pneg %p165
      // Predicated region
      $region9: #{tpu_custom_call.1} parent=5 // pred_check
        _
      $region10: #{tpu_custom_call.1} parent=5 // pred_check_branch
        %168 = sbr.rel (%p165) target = $region12
      $region11: #{tpu_custom_call.1} parent=5 // pred_region
        %s169 = ssub.s32 %s19, 1
        // Predicated region
        $region13: #{tpu_custom_call.1} parent=11 // pred_check
          %p170 = pneg %p66
        $region14: #{tpu_custom_call.1} parent=11 // pred_check_branch
          %172 = sbr.rel (%p170) target = $region16
        $region15: #{tpu_custom_call.1} parent=11 // pred_region
          %s174 = ssub.s32 128, 128
          %175 = vsyncadd [#allocation6], %s174
          %s177 = sshll.u32 [#allocation5], 4
          %s178 = int_to_ptr.vmem [resolvable:$true] %s177
          %180 = dma.hbm_to_vmem [thread:$0]  %s1, 128, %s178, [#allocation6]
        $region16: #{tpu_custom_call.1} parent=11 // pred_fallthru
          _
        // Predicated region
        $region17: #{tpu_custom_call.1} parent=11 // pred_check
          %p181 = pneg %p87
        $region18: #{tpu_custom_call.1} parent=11 // pred_check_branch
          %183 = sbr.rel (%p181) target = $region20
        $region19: #{tpu_custom_call.1} parent=11 // pred_region
          %s185 = ssub.s32 16, 16
          %186 = vsyncadd [#allocation6], %s185
          %s188 = sshll.u32 [#allocation7], 4
          %s189 = int_to_ptr.vmem [resolvable:$true] %s188
          %191 = dma.hbm_to_vmem [thread:$0]  %s2, 16, %s189, [#allocation6]
        $region20: #{tpu_custom_call.1} parent=11 // pred_fallthru
          _
        // Predicated region
        $region21: #{tpu_custom_call.1} parent=11 // pred_check
          %p192 = pneg %p108
        $region22: #{tpu_custom_call.1} parent=11 // pred_check_branch
          %194 = sbr.rel (%p192) target = $region24
        $region23: #{tpu_custom_call.1} parent=11 // pred_region
          %s196 = ssub.s32 128, 128
          %197 = vsyncadd [#allocation9], %s196
          %s199 = sshll.u32 [#allocation8], 4
          %s200 = int_to_ptr.vmem [resolvable:$true] %s199
          %202 = dma.hbm_to_vmem [thread:$0]  %s3, 128, %s200, [#allocation9]
        $region24: #{tpu_custom_call.1} parent=11 // pred_fallthru
          _
        // Predicated region
        $region25: #{tpu_custom_call.1} parent=11 // pred_check
          %p203 = pneg %p129
        $region26: #{tpu_custom_call.1} parent=11 // pred_check_branch
          %205 = sbr.rel (%p203) target = $region28
        $region27: #{tpu_custom_call.1} parent=11 // pred_region
          %s207 = ssub.s32 16, 16
          %208 = vsyncadd [#allocation9], %s207
          %s210 = sshll.u32 [#allocation10], 4
          %s211 = int_to_ptr.vmem [resolvable:$true] %s210
          %213 = dma.hbm_to_vmem [thread:$0]  %s4, 16, %s211, [#allocation9]
        $region28: #{tpu_custom_call.1} parent=11 // pred_fallthru
          _
      $region12: #{tpu_custom_call.1} parent=5 // pred_fallthru
        _
      %p214 = scmp.lt.s32.totalorder %s19, 2
      // Predicated region
      $region29: #{tpu_custom_call.1} parent=5 // pred_check
        %p215 = pneg %p214
      $region30: #{tpu_custom_call.1} parent=5 // pred_check_branch
        %217 = sbr.rel (%p215) target = $region32
      $region31: #{tpu_custom_call.1} parent=5 // pred_region
        // Predicated region
        $region33: #{tpu_custom_call.1} parent=31 // pred_check
          %p218 = pneg %p39
        $region34: #{tpu_custom_call.1} parent=31 // pred_check_branch
          %220 = sbr.rel (%p218) target = $region36
        $region35: #{tpu_custom_call.1} parent=31 // pred_region
          %s221 = sand.u32 %s29, 1
          %s222 = scalar_lea.sflag [#allocation3], %s221
          %s223 = sand.u32 %s29, 1
          %s224 = smul.addr %s223, 32
          %s225 = scalar_lea.vmem [#allocation2], %s224
          %s226 = smul.u32 4, %s19
          %s228 = ssub.s32 512, 512
          %229 = vsyncadd %s222, %s228
          %s230 = smul.addr %s226, 128
          %s231 = scalar_lea.hbm %s0, %s230
          %s232 = sshll.u32 %s225, 4
          %s233 = int_to_ptr.vmem [resolvable:$true] %s232
          %238 = dma.hbm_to_vmem [thread:$0]  %s231, 512, %s233, %s222, 128, 128, 8
        $region36: #{tpu_custom_call.1} parent=31 // pred_fallthru
          _
      $region32: #{tpu_custom_call.1} parent=5 // pred_fallthru
        _
      %p239 = scmp.le.s32.totalorder 1, %s19
      %p240 = scmp.lt.s32.totalorder %s19, 3
      %p241 = pnand %p239, %p240
      %p242 = pneg %p241
      // Predicated region
      $region37: #{tpu_custom_call.1} parent=5 // pred_check
        _
      $region38: #{tpu_custom_call.1} parent=5 // pred_check_branch
        %244 = sbr.rel (%p241) target = $region40
      $region39: #{tpu_custom_call.1} parent=5 // pred_region
        %s245 = ssub.s32 %s19, 1
        %s246 = sand.u32 %s32, 1
        %s247 = scalar_lea.sflag [#allocation3], %s246
        %s248 = sand.u32 %s32, 1
        %s249 = smul.addr %s248, 32
        %s250 = scalar_lea.vmem [#allocation2], %s249
        // Predicated region
        $region41: #{tpu_custom_call.1} parent=39 // pred_check
          %p251 = pneg %p45
        $region42: #{tpu_custom_call.1} parent=39 // pred_check_branch
          %253 = sbr.rel (%p251) target = $region44
        $region43: #{tpu_custom_call.1} parent=39 // pred_region
          %254 = dma.done %s247, 512
        $region44: #{tpu_custom_call.1} parent=39 // pred_fallthru
          _
        // Predicated region
        $region45: #{tpu_custom_call.1} parent=39 // pred_check
          %p255 = pneg %p66
        $region46: #{tpu_custom_call.1} parent=39 // pred_check_branch
          %257 = sbr.rel (%p255) target = $region48
        $region47: #{tpu_custom_call.1} parent=39 // pred_region
          %258 = dma.done [#allocation6], 128
        $region48: #{tpu_custom_call.1} parent=39 // pred_fallthru
          _
        // Predicated region
        $region49: #{tpu_custom_call.1} parent=39 // pred_check
          %p259 = pneg %p87
        $region50: #{tpu_custom_call.1} parent=39 // pred_check_branch
          %261 = sbr.rel (%p259) target = $region52
        $region51: #{tpu_custom_call.1} parent=39 // pred_region
          %262 = dma.done [#allocation6], 16
        $region52: #{tpu_custom_call.1} parent=39 // pred_fallthru
          _
        // Predicated region
        $region53: #{tpu_custom_call.1} parent=39 // pred_check
          %p263 = pneg %p108
        $region54: #{tpu_custom_call.1} parent=39 // pred_check_branch
          %265 = sbr.rel (%p263) target = $region56
        $region55: #{tpu_custom_call.1} parent=39 // pred_region
          %266 = dma.done [#allocation9], 128
        $region56: #{tpu_custom_call.1} parent=39 // pred_fallthru
          _
        // Predicated region
        $region57: #{tpu_custom_call.1} parent=39 // pred_check
          %p267 = pneg %p129
        $region58: #{tpu_custom_call.1} parent=39 // pred_check_branch
          %269 = sbr.rel (%p267) target = $region60
        $region59: #{tpu_custom_call.1} parent=39 // pred_region
          %270 = dma.done [#allocation9], 16
        $region60: #{tpu_custom_call.1} parent=39 // pred_fallthru
          _
        %s271 = sand.u32 %s32, 1
        %s272 = scalar_lea.sflag [#allocation3], %s271
        %s273 = sand.u32 %s32, 1
        %s274 = smul.addr %s273, 32
        %s275 = scalar_lea.vmem [#allocation2], %s274
        %p276 = pneg %p45
        %p277 = pneg %p42
        %p278 = pneg %p66
        %p279 = pneg %p63
        %p280 = pneg %p87
        %p281 = pneg %p84
        %p282 = pneg %p108
        %p283 = pneg %p105
        %p284 = pneg %p129
        %p285 = pneg %p126
        %p286 = pneg %p155
        %p287 = pneg %p152
        %s288 = sand.u32 %s142, 1
        %s289 = scalar_lea.sflag [#allocation4], %s288
        %s290 = sand.u32 %s142, 1
        %s291 = smul.addr %s290, 32
        %s292 = scalar_lea.vmem [#allocation11], %s291
        %s293 = smul.u32 4, %s24
        %s294 = smul.u32 4, %s24
        %v295 = vld [vmem:[%s250] sm:$0xff]
        %v296 = vld [vmem:[%s250 + $0x8] sm:$0xff]
        %v297 = vld [vmem:[%s250 + $0x10] sm:$0xff]
        %v298 = vld [vmem:[%s250 + $0x18] sm:$0xff]
        %v299 = vand.u32 2147483647, %v295
        %v300 = vand.u32 2147483647, %v296
        %v301 = vand.u32 2147483647, %v297
        %v302 = vand.u32 2147483647, %v298
        %303 = vadd.xlane.f32.xlu0 %v299
        %v304 = vpop.xlane.xlu0 %303
        %305 = vadd.xlane.f32.xlu0 %v300
        %v306 = vpop.xlane.xlu0 %305
        %307 = vadd.xlane.f32.xlu0 %v301
        %v308 = vpop.xlane.xlu0 %307
        %309 = vadd.xlane.f32.xlu0 %v302
        %v310 = vpop.xlane.xlu0 %309
        %v311 = vrcp.pop 128.0
        %v312 = vmul.f32 %v304, %v311
        %v313 = vmul.f32 %v306, %v311
        %v314 = vmul.f32 %v308, %v311
        %v315 = vmul.f32 %v310, %v311
        %v320 = vlaneseq
        %v321 = vand.u32 %v320, 127
        %v322 = vlaneseq
        %v323 = vshrl.u32 %v322, 7
        %v324 = vsub.s32 %v321, %v323
        %v325 = vrot.slane %v312, %v324
        %v326 = vlaneseq
        %v327 = vshrl.u32 %v326, 7
        %v328 = vsub.s32 %v321, %v327
        %v329 = vrot.slane %v313, %v328
        %v330 = vlaneseq
        %v331 = vshrl.u32 %v330, 7
        %v332 = vsub.s32 %v321, %v331
        %v333 = vrot.slane %v314, %v332
        %v334 = vlaneseq
        %v335 = vshrl.u32 %v334, 7
        %v336 = vsub.s32 %v321, %v335
        %v337 = vrot.slane %v315, %v336
        %vm338 = vcmask 1041409
        %v339 = vsel %vm338, %v329, %v325
        %vm340 = vcmask 1042434
        %v341 = vsel %vm340, %v333, %v339
        %vm342 = vcmask 1043459
        %v343 = vsel %vm342, %v337, %v341
        %vm345 = vcmask 60416
        %v346 = vsel %vm345, %v343, 0.0
        %347 = vadd.xlane.f32.xlu0 %v346
        %v348 = vpop.xlane.xlu0 %347
        %v349 = vrcp.pop 8.0
        %v350 = vmul.f32 %v348, %v349
        %v351 = vld [vmem:[#allocation5] sm:$0xff]
        %v352 = vld [vmem:[#allocation7] sm:$0x1]
        %v354 = vlaneseq
        %v355 = vshrl.u32 %v354, 7
        %v356 = vsub.s32 0, %v355
        %v357 = vrot.slane %v352, %v356
        %vm359 = vcmask 64512
        %v360 = vsel %vm359, %v343, 0
        %362 = vmatprep.subr.mxu0 0.0
        %363 = vmatpush1.msra.mxu0 %v351
        %364 = vmatprep.subr.mxu0 0.0
        %365 = vmatpush1.msra.mxu0 0.0
        %366 = vmatprep.subr.mxu0 0.0
        %367 = vmatpush1.msra.mxu0 0.0
        %368 = vmatprep.subr.mxu0 0.0
        %369 = vmatpush1.msra.mxu0 0.0
        %370 = vmatprep.subr.mxu0 0.0
        %371 = vmatpush1.msra.mxu0 0.0
        %372 = vmatprep.subr.mxu0 0.0
        %373 = vmatpush1.msra.mxu0 0.0
        %374 = vmatprep.subr.mxu0 0.0
        %375 = vmatpush1.msra.mxu0 0.0
        %376 = vmatprep.subr.mxu0 0.0
        %377 = vmatpush1.msra.mxu0 0.0
        %378 = vmatprep.subr.mxu0 0.0
        %379 = vmatpush1.msra.mxu0 0.0
        %380 = vmatprep.subr.mxu0 0.0
        %381 = vmatpush1.msra.mxu0 0.0
        %382 = vmatprep.subr.mxu0 0.0
        %383 = vmatpush1.msra.mxu0 0.0
        %384 = vmatprep.subr.mxu0 0.0
        %385 = vmatpush1.msra.mxu0 0.0
        %386 = vmatprep.subr.mxu0 0.0
        %387 = vmatpush1.msra.mxu0 0.0
        %388 = vmatprep.subr.mxu0 0.0
        %389 = vmatpush1.msra.mxu0 0.0
        %390 = vmatprep.subr.mxu0 0.0
        %391 = vmatpush1.msra.mxu0 0.0
        %392 = vmatprep.subr.mxu0 0.0
        %393 = vmatpush1.msra.mxu0 0.0
        %394 = vmatprep.subr.mxu0 0.0
        %395 = vmatpush1.msra.mxu0 0.0
        %396 = vmatprep.subr.mxu0 0.0
        %397 = vmatpush1.msra.mxu0 0.0
        %398 = vmatprep.subr.mxu0 0.0
        %399 = vmatpush1.msra.mxu0 0.0
        %400 = vmatprep.subr.mxu0 0.0
        %401 = vmatpush1.msra.mxu0 0.0
        %402 = vmatprep.subr.mxu0 0.0
        %403 = vmatpush1.msra.mxu0 0.0
        %404 = vmatprep.subr.mxu0 0.0
        %405 = vmatpush1.msra.mxu0 0.0
        %406 = vmatprep.subr.mxu0 0.0
        %407 = vmatpush1.msra.mxu0 0.0
        %408 = vmatprep.subr.mxu0 0.0
        %409 = vmatpush1.msra.mxu0 0.0
        %410 = vmatprep.subr.mxu0 0.0
        %411 = vmatpush1.msra.mxu0 0.0
        %412 = vmatprep.subr.mxu0 0.0
        %413 = vmatpush1.msra.mxu0 0.0
        %414 = vmatprep.subr.mxu0 0.0
        %415 = vmatpush1.msra.mxu0 0.0
        %416 = vmatprep.subr.mxu0 0.0
        %417 = vmatpush1.msra.mxu0 0.0
        %418 = vmatprep.subr.mxu0 0.0
        %419 = vmatpush1.msra.mxu0 0.0
        %420 = vmatprep.subr.mxu0 0.0
        %421 = vmatpush1.msra.mxu0 0.0
        %422 = vmatprep.subr.mxu0 0.0
        %423 = vmatpush1.msra.mxu0 0.0
        %424 = vmatprep.subr.mxu0 0.0
        %425 = vmatpush1.msra.mxu0 0.0
        %426 = vmatprep.mubr.f32.mxu0 0.0
        %427 = vmatmul.mubr.f32.gmra.mrb[0].mxu0 %v360
        %v428 = vpop.f32.mrb[0].mxu0
        %v429 = vadd.f32 %v357, %v428
        %v430 = vpop.f32.mrb[0].mxu0
        %431 = vdwg.mxu0
        %v432 = vmax.f32 %v429, 0.0
        %v433 = vld [vmem:[#allocation8] sm:$0xff]
        %v434 = vld [vmem:[#allocation10] sm:$0x1]
        %v436 = vlaneseq
        %v437 = vshrl.u32 %v436, 7
        %v438 = vsub.s32 0, %v437
        %v439 = vrot.slane %v434, %v438
        %v442 = vsel %vm359, %v432, 0
        %444 = vmatprep.subr.mxu0 0.0
        %445 = vmatpush1.msra.mxu0 %v433
        %446 = vmatprep.subr.mxu0 0.0
        %447 = vmatpush1.msra.mxu0 0.0
        %448 = vmatprep.subr.mxu0 0.0
        %449 = vmatpush1.msra.mxu0 0.0
        %450 = vmatprep.subr.mxu0 0.0
        %451 = vmatpush1.msra.mxu0 0.0
        %452 = vmatprep.subr.mxu0 0.0
        %453 = vmatpush1.msra.mxu0 0.0
        %454 = vmatprep.subr.mxu0 0.0
        %455 = vmatpush1.msra.mxu0 0.0
        %456 = vmatprep.subr.mxu0 0.0
        %457 = vmatpush1.msra.mxu0 0.0
        %458 = vmatprep.subr.mxu0 0.0
        %459 = vmatpush1.msra.mxu0 0.0
        %460 = vmatprep.subr.mxu0 0.0
        %461 = vmatpush1.msra.mxu0 0.0
        %462 = vmatprep.subr.mxu0 0.0
        %463 = vmatpush1.msra.mxu0 0.0
        %464 = vmatprep.subr.mxu0 0.0
        %465 = vmatpush1.msra.mxu0 0.0
        %466 = vmatprep.subr.mxu0 0.0
        %467 = vmatpush1.msra.mxu0 0.0
        %468 = vmatprep.subr.mxu0 0.0
        %469 = vmatpush1.msra.mxu0 0.0
        %470 = vmatprep.subr.mxu0 0.0
        %471 = vmatpush1.msra.mxu0 0.0
        %472 = vmatprep.subr.mxu0 0.0
        %473 = vmatpush1.msra.mxu0 0.0
        %474 = vmatprep.subr.mxu0 0.0
        %475 = vmatpush1.msra.mxu0 0.0
        %476 = vmatprep.subr.mxu0 0.0
        %477 = vmatpush1.msra.mxu0 0.0
        %478 = vmatprep.subr.mxu0 0.0
        %479 = vmatpush1.msra.mxu0 0.0
        %480 = vmatprep.subr.mxu0 0.0
        %481 = vmatpush1.msra.mxu0 0.0
        %482 = vmatprep.subr.mxu0 0.0
        %483 = vmatpush1.msra.mxu0 0.0
        %484 = vmatprep.subr.mxu0 0.0
        %485 = vmatpush1.msra.mxu0 0.0
        %486 = vmatprep.subr.mxu0 0.0
        %487 = vmatpush1.msra.mxu0 0.0
        %488 = vmatprep.subr.mxu0 0.0
        %489 = vmatpush1.msra.mxu0 0.0
        %490 = vmatprep.subr.mxu0 0.0
        %491 = vmatpush1.msra.mxu0 0.0
        %492 = vmatprep.subr.mxu0 0.0
        %493 = vmatpush1.msra.mxu0 0.0
        %494 = vmatprep.subr.mxu0 0.0
        %495 = vmatpush1.msra.mxu0 0.0
        %496 = vmatprep.subr.mxu0 0.0
        %497 = vmatpush1.msra.mxu0 0.0
        %498 = vmatprep.subr.mxu0 0.0
        %499 = vmatpush1.msra.mxu0 0.0
        %500 = vmatprep.subr.mxu0 0.0
        %501 = vmatpush1.msra.mxu0 0.0
        %502 = vmatprep.subr.mxu0 0.0
        %503 = vmatpush1.msra.mxu0 0.0
        %504 = vmatprep.subr.mxu0 0.0
        %505 = vmatpush1.msra.mxu0 0.0
        %506 = vmatprep.subr.mxu0 0.0
        %507 = vmatpush1.msra.mxu0 0.0
        %508 = vmatprep.mubr.f32.mxu0 0.0
        %509 = vmatmul.mubr.f32.gmra.mrb[0].mxu0 %v442
        %v510 = vpop.f32.mrb[0].mxu0
        %v511 = vadd.f32 %v439, %v510
        %v512 = vpop.f32.mrb[0].mxu0
        %513 = vdwg.mxu0
        %v514 = vxor.u32 %v511, 2147483648
        %v515 = vmul.f32 %v514, 1.442695
        %v516 = vpow.pop %v515
        %v517 = vadd.f32 %v516, 1.0
        %v518 = vrcp.pop %v517
        %v519 = vmul.f32 1.0, %v518
        %v520 = vmul.f32 %v350, %v519
        %v521 = vlaneseq
        %v522 = vshrl.u32 %v521, 7
        %v523 = vsub.s32 0, %v522
        %v524 = vrot.slane %v520, %v523
        %526 = vbcast.lane.b32.xlu0 %v524, 256
        %v527 = vpop.permute.xlu0 %526
        %v528 = vlaneseq
        %v529 = vshrl.u32 %v528, 7
        %v530 = vsub.s32 1, %v529
        %v531 = vrot.slane %v520, %v530
        %533 = vbcast.lane.b32.xlu0 %v531, 256
        %v534 = vpop.permute.xlu0 %533
        %v535 = vlaneseq
        %v536 = vshrl.u32 %v535, 7
        %v537 = vsub.s32 2, %v536
        %v538 = vrot.slane %v520, %v537
        %540 = vbcast.lane.b32.xlu0 %v538, 256
        %v541 = vpop.permute.xlu0 %540
        %v542 = vlaneseq
        %v543 = vshrl.u32 %v542, 7
        %v544 = vsub.s32 3, %v543
        %v545 = vrot.slane %v520, %v544
        %547 = vbcast.lane.b32.xlu0 %v545, 256
        %v548 = vpop.permute.xlu0 %547
        %v549 = vsub.f32 %v299, %v527
        %v550 = vsub.f32 %v300, %v534
        %v551 = vsub.f32 %v301, %v541
        %v552 = vsub.f32 %v302, %v548
        %v553 = vmax.f32 %v549, 0.0
        %v554 = vmax.f32 %v550, 0.0
        %v555 = vmax.f32 %v551, 0.0
        %v556 = vmax.f32 %v552, 0.0
        %vm557 = vcmp.lt.f32.partialorder %v295, 0.0
        %vm558 = vcmp.lt.f32.partialorder %v296, 0.0
        %vm559 = vcmp.lt.f32.partialorder %v297, 0.0
        %vm560 = vcmp.lt.f32.partialorder %v298, 0.0
        %v561 = vsub.f32 0.0, %v553
        %v562 = vsub.f32 0.0, %v554
        %v563 = vsub.f32 0.0, %v555
        %v564 = vsub.f32 0.0, %v556
        %v565 = vsel %vm557, %v561, %v553
        %v566 = vsel %vm558, %v562, %v554
        %v567 = vsel %vm559, %v563, %v555
        %v568 = vsel %vm560, %v564, %v556
        %569 = vst [vmem:[%s292] sm:$0xff] %v565
        %570 = vst [vmem:[%s292 + $0x8] sm:$0xff] %v566
        %571 = vst [vmem:[%s292 + $0x10] sm:$0xff] %v567
        %572 = vst [vmem:[%s292 + $0x18] sm:$0xff] %v568
        %s573 = sand.u32 %s142, 1
        %s574 = scalar_lea.sflag [#allocation4], %s573
        %s575 = sand.u32 %s142, 1
        %s576 = smul.addr %s575, 32
        %s577 = scalar_lea.vmem [#allocation11], %s576
        // Predicated region
        $region61: #{tpu_custom_call.1} parent=39 // pred_check
          %p578 = pneg %p152
        $region62: #{tpu_custom_call.1} parent=39 // pred_check_branch
          %580 = sbr.rel (%p578) target = $region64
        $region63: #{tpu_custom_call.1} parent=39 // pred_region
          %s581 = smul.u32 4, %s24
          %s583 = ssub.s32 512, 512
          %584 = vsyncadd %s574, %s583
          %s585 = smul.addr %s581, 128
          %s586 = scalar_lea.hbm %s5, %s585
          %s587 = sshll.u32 %s577, 4
          %s588 = int_to_ptr.vmem [resolvable:$true] %s587
          %593 = dma.vmem_to_hbm [thread:$0]  %s588, 512, %s586, %s574, 128, 128, 8
        $region64: #{tpu_custom_call.1} parent=39 // pred_fallthru
          _
      $region40: #{tpu_custom_call.1} parent=5 // pred_fallthru
        _
      %p594 = scmp.le.s32.totalorder 2, %s19
      // Predicated region
      $region65: #{tpu_custom_call.1} parent=5 // pred_check
        %p595 = pneg %p594
      $region66: #{tpu_custom_call.1} parent=5 // pred_check_branch
        %597 = sbr.rel (%p595) target = $region68
      $region67: #{tpu_custom_call.1} parent=5 // pred_region
        %s598 = ssub.s32 %s19, 2
        // Predicated region
        $region69: #{tpu_custom_call.1} parent=67 // pred_check
          %p599 = pneg %p158
        $region70: #{tpu_custom_call.1} parent=67 // pred_check_branch
          %601 = sbr.rel (%p599) target = $region72
        $region71: #{tpu_custom_call.1} parent=67 // pred_region
          %s602 = sand.u32 %s143, 1
          %s603 = scalar_lea.sflag [#allocation4], %s602
          %s604 = sand.u32 %s143, 1
          %s605 = smul.addr %s604, 32
          %s606 = scalar_lea.vmem [#allocation11], %s605
          %607 = dma.done %s603, 512
        $region72: #{tpu_custom_call.1} parent=67 // pred_fallthru
          _
      $region68: #{tpu_custom_call.1} parent=5 // pred_fallthru
        _
    $region6: #{tpu_custom_call.1} parent=1 // loop_footer
      %s23 = sadd.s32 1, %s19
    $region7: #{tpu_custom_call.1} parent=1 // loop_footer_branch
      %18 = sbr.rel target = $region3
    $region8: #{tpu_custom_call.1} parent=1 // loop_exit
      _
    %608 = vsyncpa [#allocation3], 1
    %s609 = scalar_lea.sflag [#allocation3], 1
    %610 = vsyncpa %s609, 1
    %611 = vsyncpa [#allocation6], 1
    %612 = vsyncpa [#allocation9], 1
    %613 = vsyncpa [#allocation4], 1
    %s614 = scalar_lea.sflag [#allocation4], 1
    %615 = vsyncpa %s614, 1

</llo_original>
